<compile_context>
chip_gen: v7x
topology: tpu7x:2x2x1
jax: 0.10.0
libtpu: 0.0.40
codegen_flags: <defaults>
</compile_context>

<pallas_src>
import math

import jax
import jax.numpy as jnp
from jax import lax
from jax.experimental import pallas as pl
from jax.experimental.pallas import tpu as pltpu

ETA = 1e-5      # Constants.eta (pvae convention)
EPS = 1e-7
TINY = 1e-15
_MIB = 1024 * 1024
_LANE = 128


# ----------------------------------------------------------------------------
# small helpers
# ----------------------------------------------------------------------------
def _round_up(x, m):
    return ((x + m - 1) // m) * m


def _vmem_capacity_bytes():
    try:
        return int(pltpu.get_tpu_info().vmem_capacity_bytes)
    except Exception:
        return 64 * _MIB          # v7x per-TensorCore capacity (most restrictive)


def _vmem_limit(resident_bytes, slack=8 * _MIB, headroom=16 * _MIB):
    cap = _vmem_capacity_bytes()
    return int(max(16 * _MIB, min(int(resident_bytes) + slack, cap - headroom)))


def _maybe_buffered_spec(block_shape, index_map, depth):
    """BlockSpec with a deeper pipeline when supported (adj stream, mem-bound)."""
    if depth and depth > 2 and hasattr(pl, "Buffered"):
        try:
            return pl.BlockSpec(block_shape, index_map,
                                pipeline_mode=pl.Buffered(depth))
        except Exception:
            pass
    return pl.BlockSpec(block_shape, index_map)


# ----------------------------------------------------------------------------
# Pallas kernels
# ----------------------------------------------------------------------------
def _encoder_fused_kernel(x_ref, e_ref, adj_ref, w1x_ref, w1e_ref, w2_ref, o_ref):
    """Fused 2-layer GCN, logv branch + all psi replicas lane-packed (padded to 128)."""
    adj = adj_ref[...]
    s = jnp.dot(x_ref[...], w1x_ref[...], preferred_element_type=jnp.float32)
    s = s + jnp.dot(e_ref[...], w1e_ref[...], preferred_element_type=jnp.float32)
    h = jnp.dot(adj, s.astype(jnp.bfloat16), preferred_element_type=jnp.float32)
    h = jnp.maximum(h, 0.0)
    t = jnp.dot(h.astype(jnp.bfloat16), w2_ref[...], preferred_element_type=jnp.float32)
    o = jnp.dot(adj, t.astype(jnp.bfloat16), preferred_element_type=jnp.float32)
    o_ref[...] = o.astype(o_ref.dtype)


def _encoder_layer1_kernel(x_ref, e_ref, adj_ref, w1x_ref, w1e_ref, h_ref):
    """Row-tiled layer 1: H[rows] = relu(adj[rows, :] @ (x @ W1x + e @ W1e))."""
    s = jnp.dot(x_ref[...], w1x_ref[...], preferred_element_type=jnp.float32)
    s = s + jnp.dot(e_ref[...], w1e_ref[...], preferred_element_type=jnp.float32)
    h = jnp.dot(adj_ref[...], s.astype(jnp.bfloat16), preferred_element_type=jnp.float32)
    h_ref[...] = jnp.maximum(h, 0.0).astype(h_ref.dtype)


def _encoder_layer2_kernel(h_ref, adj_ref, w2_ref, o_ref):
    """Row-tiled layer 2: out[rows] = adj[rows, :] @ (H @ W2)."""
    t = jnp.dot(h_ref[...], w2_ref[...], preferred_element_type=jnp.float32)
    o = jnp.dot(adj_ref[...], t.astype(jnp.bfloat16), preferred_element_type=jnp.float32)
    o_ref[...] = o.astype(o_ref.dtype)


def _ipd_kernel(z_ref, zt_ref, o_ref):
    # LHS row tile [TM, L] x pre-transposed lane-dense RHS [L, TN] -> [TM, TN]
    o_ref[0] = jnp.dot(z_ref[0], zt_ref[0], preferred_element_type=jnp.float32)


# ----------------------------------------------------------------------------
# encoder wrappers (single-tile fused / row-tiled pipeline)
# ----------------------------------------------------------------------------
def _encoder_single_tile(xb, eb, adjb, w1x, w1e, w2):
    N, F = xb.shape
    En = eb.shape[1]
    C1p = w1x.shape[1]
    C2p = w2.shape[1]
    in_bytes = 2 * (N * F + N * En + N * N + F * C1p + En * C1p + C1p * C2p)
    resident = 2 * in_bytes + 2 * 4 * N * C2p + 2 * 4 * N * (C1p + C2p)
    flops = 2 * (N * F * C1p + N * En * C1p + N * N * C1p
                 + N * C1p * C2p + N * N * C2p)
    return pl.pallas_call(
        _encoder_fused_kernel,
        out_shape=jax.ShapeDtypeStruct((N, C2p), jnp.float32),
        grid=(1,),
        in_specs=[
            pl.BlockSpec((N, F), lambda i: (0, 0)),
            pl.BlockSpec((N, En), lambda i: (0, 0)),
            pl.BlockSpec((N, N), lambda i: (0, 0)),
            pl.BlockSpec((F, C1p), lambda i: (0, 0)),
            pl.BlockSpec((En, C1p), lambda i: (0, 0)),
            pl.BlockSpec((C1p, C2p), lambda i: (0, 0)),
        ],
        out_specs=pl.BlockSpec((N, C2p), lambda i: (0, 0)),
        compiler_params=pltpu.CompilerParams(
            dimension_semantics=("arbitrary",),
            vmem_limit_bytes=_vmem_limit(resident)),
        cost_estimate=pl.CostEstimate(flops=int(flops), transcendentals=0,
                                      bytes_accessed=int(in_bytes + 4 * N * C2p)),
    )(xb, eb, adjb, w1x, w1e, w2)


def _encoder_row_tiled(xb, eb, adjb, w1x, w1e, w2, row_tile):
    N, F = xb.shape
    En = eb.shape[1]
    C1p = w1x.shape[1]
    C2p = w2.shape[1]
    TM = max(8, min(int(row_tile), _round_up(N, 8)))
    Np = _round_up(N, TM)
    if Np != N:
        xb = jnp.pad(xb, ((0, Np - N), (0, 0)))
        eb = jnp.pad(eb, ((0, Np - N), (0, 0)))
        adjb = jnp.pad(adjb, ((0, Np - N), (0, Np - N)))
    grid = (Np // TM,)

    # ---- layer 1: adj row tiles stream, x/e/weights resident, H row tiles out
    res1 = (4 * (Np * F + Np * En + F * C1p + En * C1p)      # resident bf16, x2 buf
            + 3 * 2 * TM * Np                                # adj tiles, 3-deep
            + 2 * 2 * TM * C1p                               # H out tiles
            + 4 * (Np * C1p + TM * C1p))                     # f32 intermediates
    flops1 = grid[0] * 2 * (Np * (F + En) * C1p + TM * Np * C1p)
    h = pl.pallas_call(
        _encoder_layer1_kernel,
        out_shape=jax.ShapeDtypeStruct((Np, C1p), jnp.bfloat16),
        grid=grid,
        in_specs=[
            pl.BlockSpec((Np, F), lambda i: (0, 0)),
            pl.BlockSpec((Np, En), lambda i: (0, 0)),
            _maybe_buffered_spec((TM, Np), lambda i: (i, 0), 3),
            pl.BlockSpec((F, C1p), lambda i: (0, 0)),
            pl.BlockSpec((En, C1p), lambda i: (0, 0)),
        ],
        out_specs=pl.BlockSpec((TM, C1p), lambda i: (i, 0)),
        compiler_params=pltpu.CompilerParams(
            dimension_semantics=("parallel",),
            vmem_limit_bytes=_vmem_limit(res1)),
        cost_estimate=pl.CostEstimate(
            flops=int(flops1), transcendentals=0,
            bytes_accessed=int(2 * (Np * Np + Np * (F + En) + (F + En) * C1p)
                               + 2 * Np * C1p)),
    )(xb, eb, adjb, w1x, w1e)

    # ---- layer 2: adj row tiles stream, H / W2 resident, output row tiles out
    res2 = (4 * (Np * C1p + C1p * C2p)
            + 3 * 2 * TM * Np
            + 2 * 4 * TM * C2p
            + 4 * (Np * C2p + TM * C2p))
    flops2 = grid[0] * 2 * (Np * C1p * C2p + TM * Np * C2p)
    out = pl.pallas_call(
        _encoder_layer2_kernel,
        out_shape=jax.ShapeDtypeStruct((Np, C2p), jnp.float32),
        grid=grid,
        in_specs=[
            pl.BlockSpec((Np, C1p), lambda i: (0, 0)),
            _maybe_buffered_spec((TM, Np), lambda i: (i, 0), 3),
            pl.BlockSpec((C1p, C2p), lambda i: (0, 0)),
        ],
        out_specs=pl.BlockSpec((TM, C2p), lambda i: (i, 0)),
        compiler_params=pltpu.CompilerParams(
            dimension_semantics=("parallel",),
            vmem_limit_bytes=_vmem_limit(res2)),
        cost_estimate=pl.CostEstimate(
            flops=int(flops2), transcendentals=0,
            bytes_accessed=int(2 * (Np * Np + Np * C1p + C1p * C2p) + 4 * Np * C2p)),
    )(h, adjb, w2)
    return out[:N]


def fused_gcn_encoder(x, e_flat, adj, w1x, w1e, w2, *,
                      force_row_tiled=False, row_tile=512):
    """x: [N,F], e_flat: [N,R*noise], adj: [N,N] -> [N, C2p] f32 (lane-padded)."""
    N, F = x.shape
    En = e_flat.shape[1]
    C1p = w1x.shape[1]
    C2p = w2.shape[1]
    xb = x.astype(jnp.bfloat16)
    eb = e_flat.astype(jnp.bfloat16)
    adjb = adj.astype(jnp.bfloat16)

    single_resident = (4 * (N * F + N * En + N * N + F * C1p + En * C1p + C1p * C2p)
                       + 2 * 4 * N * C2p + 2 * 4 * N * (C1p + C2p))
    budget = _vmem_capacity_bytes() - 16 * _MIB
    if force_row_tiled or single_resident > budget:
        return _encoder_row_tiled(xb, eb, adjb, w1x, w1e, w2, row_tile)
    return _encoder_single_tile(xb, eb, adjb, w1x, w1e, w2)


# ----------------------------------------------------------------------------
# InnerProductDecoder (act=identity, dropout=0)
# ----------------------------------------------------------------------------
def _pick_decoder_tile(N):
    for t in (512, 256, 128):
        if N % t == 0:
            return t, N
    if N > 128:
        return 128, _round_up(N, 128)
    return N, N


def inner_product_decoder(z_knl, *, tile=None):
    """z: [K, N, L] -> [K, N, N] f32 (kernel-native lane-dense layout)."""
    K, N, L = z_knl.shape
    if tile is None:
        TM, Np = _pick_decoder_tile(N)
    else:
        TM, Np = int(tile), _round_up(N, int(tile))
    zb = z_knl.astype(jnp.bfloat16)
    if Np != N:
        zb = jnp.pad(zb, ((0, 0), (0, Np - N), (0, 0)))
    ztb = jnp.transpose(zb, (0, 2, 1))                 # [K, L, Np] lane-dense RHS (tiny)
    nt = Np // TM
    resident = 2 * 2 * (TM * L + L * TM) + 2 * 4 * TM * TM
    out = pl.pallas_call(
        _ipd_kernel,
        out_shape=jax.ShapeDtypeStruct((K, Np, Np), jnp.float32),
        grid=(K, nt, nt),
        in_specs=[
            pl.BlockSpec((1, TM, L), lambda k, i, j: (k, i, 0)),
            pl.BlockSpec((1, L, TM), lambda k, i, j: (k, 0, j)),
        ],
        out_specs=pl.BlockSpec((1, TM, TM), lambda k, i, j: (k, i, j)),
        compiler_params=pltpu.CompilerParams(
            dimension_semantics=("parallel", "parallel", "parallel"),
            vmem_limit_bytes=_vmem_limit(resident)),
        cost_estimate=pl.CostEstimate(
            flops=int(2 * K * Np * Np * L), transcendentals=0,
            bytes_accessed=int(2 * 2 * K * Np * L + 4 * K * Np * Np)),
    )(zb, ztb)
    if Np != N:
        out = out[:, :N, :N]
    return out


# ----------------------------------------------------------------------------
# Poincare ball (curvature c) helpers — plain JAX glue
# ----------------------------------------------------------------------------
def _sqnorm(x):
    return jnp.sum(x * x, axis=-1, keepdims=True)


def _norm(x):
    return jnp.sqrt(jnp.maximum(_sqnorm(x), EPS))


def _artanh(x):
    return jnp.arctanh(jnp.minimum(x, 1.0 - 1e-6))


def lambda_x(x, c):
    return 2.0 / jnp.maximum(1.0 - c * _sqnorm(x), EPS)


def mobius_add(x, y, c):
    x2, y2 = _sqnorm(x), _sqnorm(y)
    xy = jnp.sum(x * y, axis=-1, keepdims=True)
    num = (1.0 + 2.0 * c * xy + c * y2) * x + (1.0 - c * x2) * y
    den = 1.0 + 2.0 * c * xy + c * c * x2 * y2
    return num / jnp.maximum(den, EPS)


def expmap0(u, c):
    sc = math.sqrt(c)
    un = jnp.sqrt(_sqnorm(u))
    safe = jnp.maximum(un, TINY)
    factor = jnp.where(un < TINY, 1.0, jnp.tanh(sc * safe) / (sc * safe))
    return factor * u


def logmap0(p, c):
    sc = math.sqrt(c)
    pn = jnp.sqrt(_sqnorm(p))
    safe = jnp.maximum(pn, TINY)
    factor = jnp.where(pn < TINY, 1.0, _artanh(sc * safe) / (sc * safe))
    return factor * p


def expmap(x, u, c):
    sc = math.sqrt(c)
    un = _norm(u)
    second = jnp.tanh(sc * lambda_x(x, c) * un / 2.0) * u / (sc * un)
    return mobius_add(x, second, c)


def logmap(x, y, c):
    sc = math.sqrt(c)
    sub = mobius_add(-x, y, c)
    sn = _norm(sub)
    return (2.0 / (sc * lambda_x(x, c))) * _artanh(sc * sn) * sub / sn


def transp0_to(y, v, c):
    return v * (1.0 - c * _sqnorm(y))


def transp_to0(x, v, c):
    return v / jnp.maximum(1.0 - c * _sqnorm(x), EPS)


def pb_dist(x, y, c):
    sc = math.sqrt(c)
    return (2.0 / sc) * _artanh(sc * _norm(mobius_add(-x, y, c)))


def logdetexp(x, y, c, dim):
    t = jnp.maximum(math.sqrt(c) * pb_dist(x, y, c), EPS)
    return (dim - 1) * jnp.log(jnp.sinh(t) / t)


# ----------------------------------------------------------------------------
# WrappedNormal on the Poincare ball (pvae semantics)
# ----------------------------------------------------------------------------
def wn_rsample(key, loc, scale, sample_shape, c):
    shape = tuple(sample_shape) + loc.shape
    v = scale * jax.random.normal(key, shape, jnp.float32)
    v = v * 0.5                       # divide by lambda at the origin (=2)
    u = transp0_to(loc, v, c)
    return expmap(loc, u, c)


def wn_log_prob(x, loc, scale, c):
    loc_b = jnp.broadcast_to(loc, x.shape).astype(jnp.float32)
    scale_b = jnp.broadcast_to(scale, x.shape).astype(jnp.float32)
    v = logmap(loc_b, x, c)
    v = transp_to0(loc_b, v, c)
    u = v * 2.0
    norm_lp = (-0.5 * (u / scale_b) ** 2 - jnp.log(scale_b)
               - 0.5 * math.log(2.0 * math.pi))
    norm_lp = norm_lp.sum(axis=-1, keepdims=True)
    lde = logdetexp(loc_b, x, c, x.shape[-1])
    return norm_lp - lde


# ----------------------------------------------------------------------------
# weight packing helpers
# ----------------------------------------------------------------------------
def _block_diag(blocks):
    rows = sum(b.shape[0] for b in blocks)
    cols = sum(b.shape[1] for b in blocks)
    out = jnp.zeros((rows, cols), jnp.float32)
    r = c = 0
    for b in blocks:
        out = out.at[r:r + b.shape[0], c:c + b.shape[1]].set(b)
        r += b.shape[0]
        c += b.shape[1]
    return out


# ----------------------------------------------------------------------------
# GCNModelVAE (forward only)
# ----------------------------------------------------------------------------
class GCNModelVAEPallas:
    def __init__(self, psi_input_dim, logv_input_dim, hidden_dim1, hidden_dim2,
                 dropout, K, J, noise_dim=32, c=1.0, seed=0):
        self.latent_dim = hidden_dim2
        self.hidden_dim1 = hidden_dim1
        self.K = K
        self.J = J
        self.noise_dim = noise_dim
        self.c = c
        # TODO(synk): dropout is a no-op here (inference path) for determinism.
        self.dropout = dropout

        assert psi_input_dim == logv_input_dim + noise_dim, \
            "forward concatenates x with Bernoulli noise of width noise_dim"

        k1, k2, k3, k4 = jax.random.split(jax.random.PRNGKey(seed), 4)

        def glorot(key, din, dout):
            return (jax.random.normal(key, (din, dout), jnp.float32)
                    * math.sqrt(2.0 / (din + dout)))

        # TODO(synk): GraphConvolution source not provided; Kipf-GAE layer
        # (weight only, no bias) assumed.
        self.w1_logv = glorot(k1, logv_input_dim, hidden_dim1)
        self.w2_logv = glorot(k2, hidden_dim1, hidden_dim2)
        self.w1_psi = glorot(k3, psi_input_dim, hidden_dim1)
        self.w2_psi = glorot(k4, hidden_dim1, hidden_dim2)

        # ---- pack combined / block-diagonal weights once (lane-packed replicas),
        #      zero-padded so the packed lane widths are multiples of 128.
        F = logv_input_dim
        R = K + J
        self.R = R
        C1 = (1 + R) * hidden_dim1
        C2 = (1 + R) * hidden_dim2
        C1p = _round_up(C1, _LANE)
        C2p = _round_up(C2, _LANE)
        self.C2 = C2

        w1f_psi = self.w1_psi[:F]          # shared feature part of layer-1 psi
        w1n_psi = self.w1_psi[F:]          # per-replica noise part

        w1x_comb = jnp.concatenate(
            [self.w1_logv, jnp.tile(w1f_psi, (1, R))], axis=1)          # [F, C1]
        w1e_comb = jnp.concatenate(
            [jnp.zeros((R * noise_dim, hidden_dim1), jnp.float32),
             _block_diag([w1n_psi] * R)], axis=1)                        # [En, C1]
        w2_comb = _block_diag([self.w2_logv] + [self.w2_psi] * R)        # [C1, C2]

        self.w1x_comb = jnp.pad(w1x_comb, ((0, 0), (0, C1p - C1))).astype(jnp.bfloat16)
        self.w1e_comb = jnp.pad(w1e_comb, ((0, 0), (0, C1p - C1))).astype(jnp.bfloat16)
        self.w2_comb = jnp.pad(w2_comb, ((0, C1p - C1), (0, C2p - C2))).astype(jnp.bfloat16)

        self._pz_mu = jnp.zeros((1, hidden_dim2), jnp.float32)
        self._pz_logvar = jnp.zeros((1, 1), jnp.float32)

    def forward(self, x, adj, key):
        k_noise, k_eps = jax.random.split(key, 2)
        c, K, J, R, L = self.c, self.K, self.J, self.R, self.latent_dim
        N = x.shape[0]

        # ----- single fused encoder (logv branch + all K+J psi replicas) -----
        e = jax.random.bernoulli(k_noise, 0.5, (N, R, self.noise_dim)).astype(jnp.float32)
        e_flat = e.reshape(N, R * self.noise_dim)
        enc = fused_gcn_encoder(x, e_flat, adj,
                                self.w1x_comb, self.w1e_comb, self.w2_comb)
        enc = enc[:, :self.C2]                                 # drop lane padding

        z_logvar = enc[:, :L]                                  # [N, L]
        mu_all = enc[:, L:].reshape(N, R, L)                   # [N, R, L]
        mu = mu_all[:, :K, :]                                  # [N, K, L]
        mu_star = mu_all[:, K:, :]                             # [N, J, L]

        # ----- log-variance branch -----
        z_log_iw = jnp.repeat((jax.nn.softplus(z_logvar) + ETA)[:, None, :], K, axis=1)
        sigma_iw1 = jnp.exp(z_log_iw / 2.0)                    # [N, K, L]
        sigma_iw2 = jnp.repeat(sigma_iw1[:, :, None, :], J + 1, axis=2)

        # ----- mean branch (K replicas) -----
        psi_iw = expmap0(mu, c)                                # [N, K, L]
        psi_iw_vec = psi_iw.mean(axis=1)                       # [N, L]

        zs_sample_iw = wn_rsample(k_eps, psi_iw, sigma_iw1, (1,), c)[0]
        zs_sample_iw2 = jnp.repeat(zs_sample_iw[:, :, None, :], J + 1, axis=2)

        # ----- J replicas for the averaged posterior -----
        psi_iw_star = expmap0(mu_star, c)                      # [N, J, L]
        psi_iw_star1 = jnp.repeat(psi_iw_star[:, None, :, :], K, axis=1)
        psi_iw_star2 = jnp.concatenate([psi_iw_star1, psi_iw[:, :, None, :]], axis=2)

        lp = wn_log_prob(zs_sample_iw2, psi_iw_star2, sigma_iw2, c).sum(axis=3)
        log_mean_ker = jax.nn.logsumexp(lp, axis=2) - math.log(J + 1)
        log_H_iw_vec = jnp.logaddexp(log_mean_ker, math.log(1e-10)) - 0.5 * z_log_iw.sum(axis=2)
        log_H_iw = log_H_iw_vec.mean(axis=0)                   # [K]

        # ----- prior -----
        pz_scale = jax.nn.softplus(self._pz_logvar) / math.log(2.0)
        log_prior_iw_vec = wn_log_prob(zs_sample_iw, self._pz_mu, pz_scale, c).sum(axis=2)
        log_prior_iw = log_prior_iw_vec.mean(axis=0)           # [K]

        # ----- decoder -----
        z_sample_iw = logmap0(zs_sample_iw, c)                 # [N, K, L]
        z_knl = jnp.transpose(z_sample_iw, (1, 0, 2))          # tiny [K, N, L]
        logits_knn = inner_product_decoder(z_knl)              # [K, N, N] lane-dense
        # TODO(synk): keep kernel-native [K,N,N] if the downstream contract
        #             allows; the [N,N,K] permute below matches the PyTorch spec.
        reconstruct_iw = jnp.transpose(logits_knn, (1, 2, 0))  # [N, N, K]

        return reconstruct_iw, log_prior_iw, log_H_iw, psi_iw_vec, psi_iw


# ----------------------------------------------------------------------------
if __name__ == "__main__":
    N = 16           # number of graph nodes
    feat_dim = 8     # node feature dimension (logv_input_dim)
    noise_dim = 8
    hidden1 = 16
    latent = 8       # hidden_dim2
    K, J = 2, 1

    key = jax.random.PRNGKey(0)
    kx, kadj, kfwd = jax.random.split(key, 3)

    x = jax.random.normal(kx, (N, feat_dim), jnp.float32)

    # deterministic symmetric normalized adjacency with self-loops
    a = (jax.random.uniform(kadj, (N, N)) < 0.3).astype(jnp.float32)
    a = jnp.maximum(a, a.T) + jnp.eye(N, dtype=jnp.float32)
    dinv = 1.0 / jnp.sqrt(a.sum(axis=1))
    adj = a * dinv[:, None] * dinv[None, :]

    model = GCNModelVAEPallas(
        psi_input_dim=feat_dim + noise_dim,
        logv_input_dim=feat_dim,
        hidden_dim1=hidden1,
        hidden_dim2=latent,
        dropout=0.0,
        K=K, J=J,
        noise_dim=noise_dim,
        c=1.0,
        seed=0,
    )

    outs = model.forward(x, adj, kfwd)
    outs = jax.block_until_ready(outs)
    recon, log_prior_iw, log_H_iw, psi_iw_vec, psi_iw = outs

    assert recon.shape == (N, N, K)
    assert log_prior_iw.shape == (K,)
    assert log_H_iw.shape == (K,)
    assert psi_iw_vec.shape == (N, latent)
    assert psi_iw.shape == (N, K, latent)
    assert all(bool(jnp.all(jnp.isfinite(o))) for o in outs)

    # ---- consistency checks for the large-N tiled paths (row-tiled encoder,
    #      tiled decoder) at a shape that actually exercises the grids.
    Nt = 384
    kc1, kc2, kc3, kc4 = jax.random.split(jax.random.PRNGKey(1), 4)
    xt = jax.random.normal(kc1, (Nt, feat_dim), jnp.float32)
    at = (jax.random.uniform(kc2, (Nt, Nt)) < 0.05).astype(jnp.float32)
    at = jnp.maximum(at, at.T) + jnp.eye(Nt, dtype=jnp.float32)
    dinv_t = 1.0 / jnp.sqrt(at.sum(axis=1))
    adjt = at * dinv_t[:, None] * dinv_t[None, :]
    et = jax.random.bernoulli(kc3, 0.5, (Nt, model.R * noise_dim)).astype(jnp.float32)

    enc_single = fused_gcn_encoder(xt, et, adjt, model.w1x_comb,
                                   model.w1e_comb, model.w2_comb)
    enc_tiled = fused_gcn_encoder(xt, et, adjt, model.w1x_comb,
                                  model.w1e_comb, model.w2_comb,
                                  force_row_tiled=True, row_tile=128)
    assert bool(jnp.allclose(enc_single, enc_tiled, atol=5e-3, rtol=5e-3))

    z_test = 0.3 * jax.random.normal(kc4, (K, Nt, latent), jnp.float32)
    dec_tiled = inner_product_decoder(z_test, tile=128)
    z_ref = z_test.astype(jnp.bfloat16).astype(jnp.float32)
    dec_ref = jnp.einsum("knl,kml->knm", z_ref, z_ref)
    assert bool(jnp.allclose(dec_tiled, dec_ref, atol=5e-3, rtol=5e-3))

    print("KERNEL_OK")
</pallas_src>

<mosaic_0001>
module attributes {stable_mosaic.version = 11 : i64} {
  func.func @_encoder_fused_kernel(%arg0: i32, %arg1: memref<16x8xbf16, #tpu.memory_space<vmem>>, %arg2: memref<16x24xbf16, #tpu.memory_space<vmem>>, %arg3: memref<16x16xbf16, #tpu.memory_space<vmem>>, %arg4: memref<8x128xbf16, #tpu.memory_space<vmem>>, %arg5: memref<24x128xbf16, #tpu.memory_space<vmem>>, %arg6: memref<128x128xbf16, #tpu.memory_space<vmem>>, %arg7: memref<16x128xf32, #tpu.memory_space<vmem>>) attributes {dimension_semantics = [#tpu.dimension_semantics<arbitrary>], iteration_bounds = array<i64: 1>, scalar_prefetch = 0 : i64, scratch_operands = 0 : i64, tpu.core_type = #tpu.core_type<tc>, window_params = [{pipeline_mode = #tpu.pipeline_mode<synchronous>, transform_indices = @transform_0, window_bounds = array<i64: 16, 8>}, {pipeline_mode = #tpu.pipeline_mode<synchronous>, transform_indices = @transform_1, window_bounds = array<i64: 16, 24>}, {pipeline_mode = #tpu.pipeline_mode<synchronous>, transform_indices = @transform_2, window_bounds = array<i64: 16, 16>}, {pipeline_mode = #tpu.pipeline_mode<synchronous>, transform_indices = @transform_3, window_bounds = array<i64: 8, 128>}, {pipeline_mode = #tpu.pipeline_mode<synchronous>, transform_indices = @transform_4, window_bounds = array<i64: 24, 128>}, {pipeline_mode = #tpu.pipeline_mode<synchronous>, transform_indices = @transform_5, window_bounds = array<i64: 128, 128>}, {pipeline_mode = #tpu.pipeline_mode<synchronous>, transform_indices = @transform_6, window_bounds = array<i64: 16, 128>}]} {
    %c0 = arith.constant 0 : index
    %c0_0 = arith.constant 0 : index
    %0 = vector.load %arg3[%c0, %c0_0] : memref<16x16xbf16, #tpu.memory_space<vmem>>, vector<16x16xbf16>
    %c0_1 = arith.constant 0 : index
    %c0_2 = arith.constant 0 : index
    %1 = vector.load %arg1[%c0_1, %c0_2] : memref<16x8xbf16, #tpu.memory_space<vmem>>, vector<16x8xbf16>
    %c0_3 = arith.constant 0 : index
    %c0_4 = arith.constant 0 : index
    %2 = vector.load %arg4[%c0_3, %c0_4] : memref<8x128xbf16, #tpu.memory_space<vmem>>, vector<8x128xbf16>
    %cst = arith.constant dense<0.000000e+00> : vector<16x128xf32>
    %3 = tpu.matmul %1, %2, %cst {dimension_numbers = #tpu.dot_dimension_numbers<[1], [0], [0], [1], [0, 0, 1, 1], [], []>} : vector<16x8xbf16>, vector<8x128xbf16>, vector<16x128xf32> -> vector<16x128xf32>
    %c0_5 = arith.constant 0 : index
    %c0_6 = arith.constant 0 : index
    %4 = vector.load %arg2[%c0_5, %c0_6] : memref<16x24xbf16, #tpu.memory_space<vmem>>, vector<16x24xbf16>
    %c0_7 = arith.constant 0 : index
    %c0_8 = arith.constant 0 : index
    %5 = vector.load %arg5[%c0_7, %c0_8] : memref<24x128xbf16, #tpu.memory_space<vmem>>, vector<24x128xbf16>
    %cst_9 = arith.constant dense<0.000000e+00> : vector<16x128xf32>
    %6 = tpu.matmul %4, %5, %cst_9 {dimension_numbers = #tpu.dot_dimension_numbers<[1], [0], [0], [1], [0, 0, 1, 1], [], []>} : vector<16x24xbf16>, vector<24x128xbf16>, vector<16x128xf32> -> vector<16x128xf32>
    %7 = arith.addf %3, %6 : vector<16x128xf32>
    %8 = arith.truncf %7 : vector<16x128xf32> to vector<16x128xbf16>
    %cst_10 = arith.constant dense<0.000000e+00> : vector<16x128xf32>
    %9 = tpu.matmul %0, %8, %cst_10 {dimension_numbers = #tpu.dot_dimension_numbers<[1], [0], [0], [1], [0, 0, 1, 1], [], []>} : vector<16x16xbf16>, vector<16x128xbf16>, vector<16x128xf32> -> vector<16x128xf32>
    %cst_11 = arith.constant 0.000000e+00 : f32
    %10 = vector.broadcast %cst_11 : f32 to vector<16x128xf32>
    %11 = arith.maximumf %9, %10 : vector<16x128xf32>
    %12 = arith.truncf %11 : vector<16x128xf32> to vector<16x128xbf16>
    %c0_12 = arith.constant 0 : index
    %c0_13 = arith.constant 0 : index
    %13 = vector.load %arg6[%c0_12, %c0_13] : memref<128x128xbf16, #tpu.memory_space<vmem>>, vector<128x128xbf16>
    %cst_14 = arith.constant dense<0.000000e+00> : vector<16x128xf32>
    %14 = tpu.matmul %12, %13, %cst_14 {dimension_numbers = #tpu.dot_dimension_numbers<[1], [0], [0], [1], [0, 0, 1, 1], [], []>} : vector<16x128xbf16>, vector<128x128xbf16>, vector<16x128xf32> -> vector<16x128xf32>
    %15 = arith.truncf %14 : vector<16x128xf32> to vector<16x128xbf16>
    %cst_15 = arith.constant dense<0.000000e+00> : vector<16x128xf32>
    %16 = tpu.matmul %0, %15, %cst_15 {dimension_numbers = #tpu.dot_dimension_numbers<[1], [0], [0], [1], [0, 0, 1, 1], [], []>} : vector<16x16xbf16>, vector<16x128xbf16>, vector<16x128xf32> -> vector<16x128xf32>
    %c0_16 = arith.constant 0 : index
    %c0_17 = arith.constant 0 : index
    %17 = vector.load %arg7[%c0_16, %c0_17] : memref<16x128xf32, #tpu.memory_space<vmem>>, vector<16x128xf32>
    tpu.vector_store %arg7[%c0_16, %c0_17], %16 {strides = array<i32>} : memref<16x128xf32, #tpu.memory_space<vmem>>, vector<16x128xf32>,
    return
  }
  func.func @transform_0(%arg0: i32) -> (i32, i32) {
    %c0_i32 = arith.constant 0 : i32
    %c0_i32_0 = arith.constant 0 : i32
    %c0_i32_1 = arith.constant 0 : i32
    return %c0_i32, %c0_i32_0 : i32, i32
  }
  func.func @transform_1(%arg0: i32) -> (i32, i32) {
    %c0_i32 = arith.constant 0 : i32
    %c0_i32_0 = arith.constant 0 : i32
    %c0_i32_1 = arith.constant 0 : i32
    return %c0_i32, %c0_i32_0 : i32, i32
  }
  func.func @transform_2(%arg0: i32) -> (i32, i32) {
    %c0_i32 = arith.constant 0 : i32
    %c0_i32_0 = arith.constant 0 : i32
    %c0_i32_1 = arith.constant 0 : i32
    return %c0_i32, %c0_i32_0 : i32, i32
  }
  func.func @transform_3(%arg0: i32) -> (i32, i32) {
    %c0_i32 = arith.constant 0 : i32
    %c0_i32_0 = arith.constant 0 : i32
    %c0_i32_1 = arith.constant 0 : i32
    return %c0_i32, %c0_i32_0 : i32, i32
  }
  func.func @transform_4(%arg0: i32) -> (i32, i32) {
    %c0_i32 = arith.constant 0 : i32
    %c0_i32_0 = arith.constant 0 : i32
    %c0_i32_1 = arith.constant 0 : i32
    return %c0_i32, %c0_i32_0 : i32, i32
  }
  func.func @transform_5(%arg0: i32) -> (i32, i32) {
    %c0_i32 = arith.constant 0 : i32
    %c0_i32_0 = arith.constant 0 : i32
    %c0_i32_1 = arith.constant 0 : i32
    return %c0_i32, %c0_i32_0 : i32, i32
  }
  func.func @transform_6(%arg0: i32) -> (i32, i32) {
    %c0_i32 = arith.constant 0 : i32
    %c0_i32_0 = arith.constant 0 : i32
    %c0_i32_1 = arith.constant 0 : i32
    return %c0_i32, %c0_i32_0 : i32, i32
  }
}

</mosaic_0001>

<llo_original>
// kernel: tpu_custom_call.1
$region0: #{tpu_custom_call.1}
  #allocation0 [shape = 'u32[]', space=smem, size = 0x4, offset = 0x4, fixed_abs, tag = 'smem constant byte address 0x4 - core index']
  #allocation1 [shape = 'u32[144,128]{1,0:T(1,128)}', space=vmem, size = 0x12000, scoped, tag = 'internal scratch']
  %s0 = inlined_call_operand.vmem [shape: bf16[16,8], index: 0, kind: input, shape index: {}]
  %s1 = inlined_call_operand.vmem [shape: bf16[16,24], index: 1, kind: input, shape index: {}]
  %s2 = inlined_call_operand.hbm [shape: bf16[16,16], index: 2, kind: input, shape index: {}]
  %s3 = inlined_call_operand.hbm [shape: bf16[8,128], index: 3, kind: input, shape index: {}]
  %s4 = inlined_call_operand.vmem [shape: bf16[24,128], index: 4, kind: input, shape index: {}]
  %s5 = inlined_call_operand.hbm [shape: bf16[128,128], index: 5, kind: input, shape index: {}]
  %s6 = inlined_call_operand.hbm [shape: f32[16,128], index: 6, kind: output, shape index: {}]
  %s7 = sld [smem:[#allocation0]]
  $region46: #{tpu_custom_call.1} parent=0
    _
  %s9 = ssub.s32 1, %s7
  %s10 = scalar_select 0, %s9, %s7
  $region1: #{tpu_custom_call.1} parent=0
    #allocation2 [shape = 'u8[4096]{0}', space=vmem, size = 0x1000, scoped, tag = 'input window, operand 2, single buffered']
    #allocation3 [shape = 's32[1]{0}', space=sflag, size = 0x4, scoped, tag = 'scoped memory for tpu_custom_call.1']
    #allocation4 [shape = 's32[1]{0}', space=sflag, size = 0x4, scoped, tag = 'scoped memory for tpu_custom_call.1']
    #allocation5 [shape = 'u8[2048]{0}', space=vmem, size = 0x800, scoped, tag = 'input window, operand 3, single buffered']
    #allocation6 [shape = 's32[1]{0}', space=sflag, size = 0x4, scoped, tag = 'scoped memory for tpu_custom_call.1']
    #allocation7 [shape = 'u8[32768]{0}', space=vmem, size = 0x8000, scoped, tag = 'input window, operand 5, single buffered']
    #allocation8 [shape = 'u8[8192]{0}', space=vmem, size = 0x2000, scoped, tag = 'output window, operand 0, single buffered']
    %11 = vsyncpa [#allocation3], 0
    %12 = vsyncpa [#allocation6], 0
    %13 = vsyncpa [#allocation4], 0
    // Predicated region
    $region2: #{tpu_custom_call.1} parent=1 // pred_check
      _
    $region3: #{tpu_custom_call.1} parent=1 // pred_check_branch
      %15 = sbr.rel (0) target = $region5
    $region4: #{tpu_custom_call.1} parent=1 // pred_region
      _
    $region5: #{tpu_custom_call.1} parent=1 // pred_fallthru
      _
    // Predicated region
    $region6: #{tpu_custom_call.1} parent=1 // pred_check
      _
    $region7: #{tpu_custom_call.1} parent=1 // pred_check_branch
      %17 = sbr.rel (0) target = $region9
    $region8: #{tpu_custom_call.1} parent=1 // pred_region
      _
    $region9: #{tpu_custom_call.1} parent=1 // pred_fallthru
      _
    // Predicated region
    $region10: #{tpu_custom_call.1} parent=1 // pred_check
      _
    $region11: #{tpu_custom_call.1} parent=1 // pred_check_branch
      %19 = sbr.rel (0) target = $region13
    $region12: #{tpu_custom_call.1} parent=1 // pred_region
      %s21 = ssub.s32 128, 128
      %22 = vsyncadd [#allocation3], %s21
      %s23 = sshll.u32 [#allocation2], 4
      %s24 = int_to_ptr.vmem [resolvable:$true] %s23
      %29 = dma.hbm_to_vmem [thread:$0]  %s2, 128, %s24, [#allocation3], 64, 64, 4
    $region13: #{tpu_custom_call.1} parent=1 // pred_fallthru
      _
    // Predicated region
    $region14: #{tpu_custom_call.1} parent=1 // pred_check
      _
    $region15: #{tpu_custom_call.1} parent=1 // pred_check_branch
      %31 = sbr.rel (0) target = $region17
    $region16: #{tpu_custom_call.1} parent=1 // pred_region
      %s33 = ssub.s32 64, 64
      %34 = vsyncadd [#allocation6], %s33
      %s36 = sshll.u32 [#allocation5], 4
      %s37 = int_to_ptr.vmem [resolvable:$true] %s36
      %39 = dma.hbm_to_vmem [thread:$0]  %s3, 64, %s37, [#allocation6]
    $region17: #{tpu_custom_call.1} parent=1 // pred_fallthru
      _
    // Predicated region
    $region18: #{tpu_custom_call.1} parent=1 // pred_check
      _
    $region19: #{tpu_custom_call.1} parent=1 // pred_check_branch
      %41 = sbr.rel (0) target = $region21
    $region20: #{tpu_custom_call.1} parent=1 // pred_region
      _
    $region21: #{tpu_custom_call.1} parent=1 // pred_fallthru
      _
    // Predicated region
    $region22: #{tpu_custom_call.1} parent=1 // pred_check
      _
    $region23: #{tpu_custom_call.1} parent=1 // pred_check_branch
      %43 = sbr.rel (0) target = $region25
    $region24: #{tpu_custom_call.1} parent=1 // pred_region
      %s45 = ssub.s32 1024, 1024
      %46 = vsyncadd [#allocation6], %s45
      %s47 = sshll.u32 [#allocation7], 4
      %s48 = int_to_ptr.vmem [resolvable:$true] %s47
      %53 = dma.hbm_to_vmem [thread:$0]  %s5, 1024, %s48, [#allocation6], 64, 64, 4
    $region25: #{tpu_custom_call.1} parent=1 // pred_fallthru
      _
    // Predicated region
    $region26: #{tpu_custom_call.1} parent=1 // pred_check
      _
    $region27: #{tpu_custom_call.1} parent=1 // pred_check_branch
      %55 = sbr.rel (0) target = $region29
    $region28: #{tpu_custom_call.1} parent=1 // pred_region
      %56 = dma.done [#allocation3], 128
    $region29: #{tpu_custom_call.1} parent=1 // pred_fallthru
      _
    // Predicated region
    $region30: #{tpu_custom_call.1} parent=1 // pred_check
      _
    $region31: #{tpu_custom_call.1} parent=1 // pred_check_branch
      %58 = sbr.rel (0) target = $region33
    $region32: #{tpu_custom_call.1} parent=1 // pred_region
      %59 = dma.done [#allocation6], 64
    $region33: #{tpu_custom_call.1} parent=1 // pred_fallthru
      _
    // Predicated region
    $region34: #{tpu_custom_call.1} parent=1 // pred_check
      _
    $region35: #{tpu_custom_call.1} parent=1 // pred_check_branch
      %61 = sbr.rel (0) target = $region37
    $region36: #{tpu_custom_call.1} parent=1 // pred_region
      %62 = dma.done [#allocation6], 1024
    $region37: #{tpu_custom_call.1} parent=1 // pred_fallthru
      _
    %v64 = vld [vmem:[#allocation2] sm:$0xf]
    %v65 = vld [vmem:[#allocation2 + $0x4] sm:$0xf]
    %v66 = vld [vmem:[%s0] sm:$0xf]
    %v67 = vld [vmem:[%s0 + $0x4] sm:$0xf]
    %v68 = vld [vmem:[#allocation5] sm:$0xf]
    %v69 = vld [vmem:[%s1] sm:$0xf]
    %v70 = vld [vmem:[%s1 + $0x4] sm:$0xf]
    %v71 = vld [vmem:[%s4] sm:$0xf]
    %v72 = vld [vmem:[%s4 + $0x4] sm:$0xf]
    %v73 = vld [vmem:[%s4 + $0x8] sm:$0xf]
    %v76 = vunpack.c.l.b16 %v69
    %v77 = vunpack.c.l.b16 %v70
    %v78 = vpack.c.b16 %v77, %v76
    %v82 = vunpack.c.l.b16 %v71
    %v83 = vunpack.c.l.b16 %v72
    %v84 = vunpack.c.l.b16 %v73
    %v85 = vpack.c.b16 %v83, %v82
    %v86 = vpack.c.b16 %v84, %v84
    %vm88 = vcmask 195584
    %v90 = vsel %vm88, %v78, 0
    %vm92 = vcmask 1043456
    %v94 = vsel %vm92, %v86, 0
    %96 = vmatprep.subr.bf16.mxu0 0
    %97 = vmatpush1.bf16.msra.mxu0 %v85
    %98 = vmatprep.subr.bf16.mxu0 0
    %99 = vmatpush1.bf16.msra.mxu0 %v94
    %100 = vmatprep.subr.bf16.mxu0 0
    %101 = vmatpush1.bf16.msra.mxu0 0
    %102 = vmatprep.subr.bf16.mxu0 0
    %103 = vmatpush1.bf16.msra.mxu0 0
    %104 = vmatprep.subr.bf16.mxu0 0
    %105 = vmatpush1.bf16.msra.mxu0 0
    %106 = vmatprep.subr.bf16.mxu0 0
    %107 = vmatpush1.bf16.msra.mxu0 0
    %108 = vmatprep.subr.bf16.mxu0 0
    %109 = vmatpush1.bf16.msra.mxu0 0
    %110 = vmatprep.subr.bf16.mxu0 0
    %111 = vmatpush1.bf16.msra.mxu0 0
    %112 = vmatprep.subr.bf16.mxu0 0
    %113 = vmatpush1.bf16.msra.mxu0 0
    %114 = vmatprep.subr.bf16.mxu0 0
    %115 = vmatpush1.bf16.msra.mxu0 0
    %116 = vmatprep.subr.bf16.mxu0 0
    %117 = vmatpush1.bf16.msra.mxu0 0
    %118 = vmatprep.subr.bf16.mxu0 0
    %119 = vmatpush1.bf16.msra.mxu0 0
    %120 = vmatprep.subr.bf16.mxu0 0
    %121 = vmatpush1.bf16.msra.mxu0 0
    %122 = vmatprep.subr.bf16.mxu0 0
    %123 = vmatpush1.bf16.msra.mxu0 0
    %124 = vmatprep.subr.bf16.mxu0 0
    %125 = vmatpush1.bf16.msra.mxu0 0
    %126 = vmatprep.subr.bf16.mxu0 0
    %127 = vmatpush1.bf16.msra.mxu0 0
    %128 = vmatprep.mubr.bf16.mxu0 0
    %129 = vmatmul.mubr.bf16.gmra.mrb[0].mxu0 %v90
    %v130 = vpop.f32.mrb[0].mxu0
    %v131 = vadd.f32 0.0, %v130
    %v132 = vpop.f32.mrb[0].mxu0
    %v133 = vpop.f32.mrb[0].mxu0
    %v134 = vadd.f32 0.0, %v133
    %v135 = vpop.f32.mrb[0].mxu0
    %136 = vdwg.mxu0
    %v139 = vunpack.c.l.b16 %v66
    %v140 = vunpack.c.l.b16 %v67
    %v141 = vpack.c.b16 %v140, %v139
    %vm142 = vcmask 64512
    %v144 = vsel %vm142, %v141, 0
    %v147 = vsel %vm92, %v68, 0
    %149 = vmatprep.subr.bf16.mxu0 0
    %150 = vmatpush1.bf16.msra.mxu0 %v147
    %151 = vmatprep.subr.bf16.mxu0 0
    %152 = vmatpush1.bf16.msra.mxu0 0
    %153 = vmatprep.subr.bf16.mxu0 0
    %154 = vmatpush1.bf16.msra.mxu0 0
    %155 = vmatprep.subr.bf16.mxu0 0
    %156 = vmatpush1.bf16.msra.mxu0 0
    %157 = vmatprep.subr.bf16.mxu0 0
    %158 = vmatpush1.bf16.msra.mxu0 0
    %159 = vmatprep.subr.bf16.mxu0 0
    %160 = vmatpush1.bf16.msra.mxu0 0
    %161 = vmatprep.subr.bf16.mxu0 0
    %162 = vmatpush1.bf16.msra.mxu0 0
    %163 = vmatprep.subr.bf16.mxu0 0
    %164 = vmatpush1.bf16.msra.mxu0 0
    %165 = vmatprep.subr.bf16.mxu0 0
    %166 = vmatpush1.bf16.msra.mxu0 0
    %167 = vmatprep.subr.bf16.mxu0 0
    %168 = vmatpush1.bf16.msra.mxu0 0
    %169 = vmatprep.subr.bf16.mxu0 0
    %170 = vmatpush1.bf16.msra.mxu0 0
    %171 = vmatprep.subr.bf16.mxu0 0
    %172 = vmatpush1.bf16.msra.mxu0 0
    %173 = vmatprep.subr.bf16.mxu0 0
    %174 = vmatpush1.bf16.msra.mxu0 0
    %175 = vmatprep.subr.bf16.mxu0 0
    %176 = vmatpush1.bf16.msra.mxu0 0
    %177 = vmatprep.subr.bf16.mxu0 0
    %178 = vmatpush1.bf16.msra.mxu0 0
    %179 = vmatprep.subr.bf16.mxu0 0
    %180 = vmatpush1.bf16.msra.mxu0 0
    %181 = vmatprep.mubr.bf16.mxu0 0
    %182 = vmatmul.mubr.bf16.gmra.mrb[0].mxu0 %v144
    %v183 = vpop.f32.mrb[0].mxu0
    %v184 = vadd.f32 %v131, %v183
    %v185 = vpop.f32.mrb[0].mxu0
    %v186 = vpop.f32.mrb[0].mxu0
    %v187 = vadd.f32 %v134, %v186
    %v188 = vpop.f32.mrb[0].mxu0
    %189 = vdwg.mxu0
    %v190 = vpack.c.bf16 %v187, %v184
    %v193 = vunpack.c.l.b16 %v64
    %v194 = vunpack.c.l.b16 %v65
    %v195 = vpack.c.b16 %v194, %v193
    %vm196 = vcmask 130048
    %v198 = vsel %vm196, %v195, 0
    %200 = vmatprep.subr.bf16.mxu0 0
    %201 = vmatpush1.bf16.msra.mxu0 %v190
    %202 = vmatprep.subr.bf16.mxu0 0
    %203 = vmatpush1.bf16.msra.mxu0 0
    %204 = vmatprep.subr.bf16.mxu0 0
    %205 = vmatpush1.bf16.msra.mxu0 0
    %206 = vmatprep.subr.bf16.mxu0 0
    %207 = vmatpush1.bf16.msra.mxu0 0
    %208 = vmatprep.subr.bf16.mxu0 0
    %209 = vmatpush1.bf16.msra.mxu0 0
    %210 = vmatprep.subr.bf16.mxu0 0
    %211 = vmatpush1.bf16.msra.mxu0 0
    %212 = vmatprep.subr.bf16.mxu0 0
    %213 = vmatpush1.bf16.msra.mxu0 0
    %214 = vmatprep.subr.bf16.mxu0 0
    %215 = vmatpush1.bf16.msra.mxu0 0
    %216 = vmatprep.subr.bf16.mxu0 0
    %217 = vmatpush1.bf16.msra.mxu0 0
    %218 = vmatprep.subr.bf16.mxu0 0
    %219 = vmatpush1.bf16.msra.mxu0 0
    %220 = vmatprep.subr.bf16.mxu0 0
    %221 = vmatpush1.bf16.msra.mxu0 0
    %222 = vmatprep.subr.bf16.mxu0 0
    %223 = vmatpush1.bf16.msra.mxu0 0
    %224 = vmatprep.subr.bf16.mxu0 0
    %225 = vmatpush1.bf16.msra.mxu0 0
    %226 = vmatprep.subr.bf16.mxu0 0
    %227 = vmatpush1.bf16.msra.mxu0 0
    %228 = vmatprep.subr.bf16.mxu0 0
    %229 = vmatpush1.bf16.msra.mxu0 0
    %230 = vmatprep.subr.bf16.mxu0 0
    %231 = vmatpush1.bf16.msra.mxu0 0
    %232 = vmatprep.mubr.bf16.mxu0 0
    %233 = vmatmul.mubr.bf16.gmra.mrb[0].mxu0 %v198
    %v234 = vpop.f32.mrb[0].mxu0
    %v235 = vadd.f32 0.0, %v234
    %v236 = vpop.f32.mrb[0].mxu0
    %v237 = vpop.f32.mrb[0].mxu0
    %v238 = vadd.f32 0.0, %v237
    %v239 = vpop.f32.mrb[0].mxu0
    %240 = vdwg.mxu0
    %v241 = vmax.f32 %v235, 0.0
    %v242 = vmax.f32 %v238, 0.0
    %v243 = vpack.c.bf16 %v242, %v241
    %v244 = vld [vmem:[#allocation7] sm:$0xf]
    %v245 = vld [vmem:[#allocation7 + $0x4] sm:$0xf]
    %v246 = vld [vmem:[#allocation7 + $0x8] sm:$0xf]
    %v247 = vld [vmem:[#allocation7 + $0xc] sm:$0xf]
    %v248 = vld [vmem:[#allocation7 + $0x10] sm:$0xf]
    %v249 = vld [vmem:[#allocation7 + $0x14] sm:$0xf]
    %v250 = vld [vmem:[#allocation7 + $0x18] sm:$0xf]
    %v251 = vld [vmem:[#allocation7 + $0x1c] sm:$0xf]
    %v252 = vld [vmem:[#allocation7 + $0x20] sm:$0xf]
    %v253 = vld [vmem:[#allocation7 + $0x24] sm:$0xf]
    %v254 = vld [vmem:[#allocation7 + $0x28] sm:$0xf]
    %v255 = vld [vmem:[#allocation7 + $0x2c] sm:$0xf]
    %v256 = vld [vmem:[#allocation7 + $0x30] sm:$0xf]
    %v257 = vld [vmem:[#allocation7 + $0x34] sm:$0xf]
    %v258 = vld [vmem:[#allocation7 + $0x38] sm:$0xf]
    %v259 = vld [vmem:[#allocation7 + $0x3c] sm:$0xf]
    %v276 = vunpack.c.l.b16 %v244
    %v277 = vunpack.c.l.b16 %v245
    %v278 = vunpack.c.l.b16 %v246
    %v279 = vunpack.c.l.b16 %v247
    %v280 = vunpack.c.l.b16 %v248
    %v281 = vunpack.c.l.b16 %v249
    %v282 = vunpack.c.l.b16 %v250
    %v283 = vunpack.c.l.b16 %v251
    %v284 = vunpack.c.l.b16 %v252
    %v285 = vunpack.c.l.b16 %v253
    %v286 = vunpack.c.l.b16 %v254
    %v287 = vunpack.c.l.b16 %v255
    %v288 = vunpack.c.l.b16 %v256
    %v289 = vunpack.c.l.b16 %v257
    %v290 = vunpack.c.l.b16 %v258
    %v291 = vunpack.c.l.b16 %v259
    %v292 = vpack.c.b16 %v277, %v276
    %v293 = vpack.c.b16 %v279, %v278
    %v294 = vpack.c.b16 %v281, %v280
    %v295 = vpack.c.b16 %v283, %v282
    %v296 = vpack.c.b16 %v285, %v284
    %v297 = vpack.c.b16 %v287, %v286
    %v298 = vpack.c.b16 %v289, %v288
    %v299 = vpack.c.b16 %v291, %v290
    %308 = vmatprep.subr.bf16.mxu0 0
    %309 = vmatpush1.bf16.msra.mxu0 %v292
    %310 = vmatprep.subr.bf16.mxu0 0
    %311 = vmatpush1.bf16.msra.mxu0 %v293
    %312 = vmatprep.subr.bf16.mxu0 0
    %313 = vmatpush1.bf16.msra.mxu0 %v294
    %314 = vmatprep.subr.bf16.mxu0 0
    %315 = vmatpush1.bf16.msra.mxu0 %v295
    %316 = vmatprep.subr.bf16.mxu0 0
    %317 = vmatpush1.bf16.msra.mxu0 %v296
    %318 = vmatprep.subr.bf16.mxu0 0
    %319 = vmatpush1.bf16.msra.mxu0 %v297
    %320 = vmatprep.subr.bf16.mxu0 0
    %321 = vmatpush1.bf16.msra.mxu0 %v298
    %322 = vmatprep.subr.bf16.mxu0 0
    %323 = vmatpush1.bf16.msra.mxu0 %v299
    %324 = vmatprep.subr.bf16.mxu0 0
    %325 = vmatpush1.bf16.msra.mxu0 0
    %326 = vmatprep.subr.bf16.mxu0 0
    %327 = vmatpush1.bf16.msra.mxu0 0
    %328 = vmatprep.subr.bf16.mxu0 0
    %329 = vmatpush1.bf16.msra.mxu0 0
    %330 = vmatprep.subr.bf16.mxu0 0
    %331 = vmatpush1.bf16.msra.mxu0 0
    %332 = vmatprep.subr.bf16.mxu0 0
    %333 = vmatpush1.bf16.msra.mxu0 0
    %334 = vmatprep.subr.bf16.mxu0 0
    %335 = vmatpush1.bf16.msra.mxu0 0
    %336 = vmatprep.subr.bf16.mxu0 0
    %337 = vmatpush1.bf16.msra.mxu0 0
    %338 = vmatprep.subr.bf16.mxu0 0
    %339 = vmatpush1.bf16.msra.mxu0 0
    %340 = vmatprep.mubr.bf16.mxu0 0
    %341 = vmatmul.mubr.bf16.gmra.mrb[0].mxu0 %v243
    %v342 = vpop.f32.mrb[0].mxu0
    %v343 = vadd.f32 0.0, %v342
    %v344 = vpop.f32.mrb[0].mxu0
    %v345 = vpop.f32.mrb[0].mxu0
    %v346 = vadd.f32 0.0, %v345
    %v347 = vpop.f32.mrb[0].mxu0
    %348 = vdwg.mxu0
    %v349 = vpack.c.bf16 %v346, %v343
    %350 = vmatprep.subr.bf16.mxu0 0
    %351 = vmatpush1.bf16.msra.mxu0 %v349
    %352 = vmatprep.subr.bf16.mxu0 0
    %353 = vmatpush1.bf16.msra.mxu0 0
    %354 = vmatprep.subr.bf16.mxu0 0
    %355 = vmatpush1.bf16.msra.mxu0 0
    %356 = vmatprep.subr.bf16.mxu0 0
    %357 = vmatpush1.bf16.msra.mxu0 0
    %358 = vmatprep.subr.bf16.mxu0 0
    %359 = vmatpush1.bf16.msra.mxu0 0
    %360 = vmatprep.subr.bf16.mxu0 0
    %361 = vmatpush1.bf16.msra.mxu0 0
    %362 = vmatprep.subr.bf16.mxu0 0
    %363 = vmatpush1.bf16.msra.mxu0 0
    %364 = vmatprep.subr.bf16.mxu0 0
    %365 = vmatpush1.bf16.msra.mxu0 0
    %366 = vmatprep.subr.bf16.mxu0 0
    %367 = vmatpush1.bf16.msra.mxu0 0
    %368 = vmatprep.subr.bf16.mxu0 0
    %369 = vmatpush1.bf16.msra.mxu0 0
    %370 = vmatprep.subr.bf16.mxu0 0
    %371 = vmatpush1.bf16.msra.mxu0 0
    %372 = vmatprep.subr.bf16.mxu0 0
    %373 = vmatpush1.bf16.msra.mxu0 0
    %374 = vmatprep.subr.bf16.mxu0 0
    %375 = vmatpush1.bf16.msra.mxu0 0
    %376 = vmatprep.subr.bf16.mxu0 0
    %377 = vmatpush1.bf16.msra.mxu0 0
    %378 = vmatprep.subr.bf16.mxu0 0
    %379 = vmatpush1.bf16.msra.mxu0 0
    %380 = vmatprep.subr.bf16.mxu0 0
    %381 = vmatpush1.bf16.msra.mxu0 0
    %382 = vmatprep.mubr.bf16.mxu0 0
    %383 = vmatmul.mubr.bf16.gmra.mrb[0].mxu0 %v198
    %v384 = vpop.f32.mrb[0].mxu0
    %v385 = vadd.f32 0.0, %v384
    %v386 = vpop.f32.mrb[0].mxu0
    %v387 = vpop.f32.mrb[0].mxu0
    %v388 = vadd.f32 0.0, %v387
    %v389 = vpop.f32.mrb[0].mxu0
    %390 = vdwg.mxu0
    %391 = vst [vmem:[#allocation8] sm:$0xff] %v385
    %392 = vst [vmem:[#allocation8 + $0x8] sm:$0xff] %v388
    // Predicated region
    $region38: #{tpu_custom_call.1} parent=1 // pred_check
      _
    $region39: #{tpu_custom_call.1} parent=1 // pred_check_branch
      %394 = sbr.rel (0) target = $region41
    $region40: #{tpu_custom_call.1} parent=1 // pred_region
      %s396 = ssub.s32 256, 256
      %397 = vsyncadd [#allocation4], %s396
      %s398 = sshll.u32 [#allocation8], 4
      %s399 = int_to_ptr.vmem [resolvable:$true] %s398
      %404 = dma.vmem_to_hbm [thread:$0]  %s399, 256, %s6, [#allocation4], 128, 128, 8
    $region41: #{tpu_custom_call.1} parent=1 // pred_fallthru
      _
    // Predicated region
    $region42: #{tpu_custom_call.1} parent=1 // pred_check
      _
    $region43: #{tpu_custom_call.1} parent=1 // pred_check_branch
      %406 = sbr.rel (0) target = $region45
    $region44: #{tpu_custom_call.1} parent=1 // pred_region
      %407 = dma.done [#allocation4], 256
    $region45: #{tpu_custom_call.1} parent=1 // pred_fallthru
      _
    %408 = vsyncpa [#allocation3], 1
    %409 = vsyncpa [#allocation6], 1
    %410 = vsyncpa [#allocation4], 1

</llo_original>
